<compile_context>
chip_gen: v7x
topology: tpu7x:2x2x1
jax: 0.10.0
libtpu: 0.0.40
codegen_flags: <defaults>
</compile_context>

<pallas_src>
import jax
import jax.numpy as jnp
from jax.experimental import pallas as pl
from jax.experimental.pallas import tpu as pltpu

_TARGET_TILE_BYTES = 4 << 20  # ~4 MiB per input block


def _drop_path_kernel(scale_ref, x_ref, o_ref):
    """One grid step: one (TB, TN) tile of the flat (B, N) view.

    scale_ref : VMEM ref, shape (TB, 1), float32 -- per-sample scale
                (0.0 for dropped samples, 1/keep_prob for kept samples)
    x_ref     : VMEM ref, shape (TB, TN)
    o_ref     : VMEM ref, shape (TB, TN)
    """
    # Broadcast multiply in f32 (scale is f32 -> promotes), single cast on the
    # store.  The op is DMA-bound, so the f32 promote is free on all chips
    # (and required on v5e, which has no bf16 VALU anyway).
    o_ref[...] = (x_ref[...] * scale_ref[...]).astype(o_ref.dtype)


def _choose_tiles(b: int, n: int, itemsize: int) -> tuple[int, int]:
    """Pick (TB, TN) for the flat (B, N) view.

    TB is a multiple of 8 or == B; TN is a multiple of 128 or == N, so the
    (8, 128) block-shape rule always holds.  Targets ~_TARGET_TILE_BYTES per
    input tile.
    """
    target_elems = max(_TARGET_TILE_BYTES // itemsize, 8 * 128)
    # Minimum row granularity satisfying the sublane rule.
    tb = b if b < 8 else 8
    if n >= 128 and tb * n > target_elems:
        # A tb-row slab of full rows is already over target: tile columns.
        tn = max(128, (target_elems // tb) // 128 * 128)
        return tb, tn
    # Full rows fit comfortably: take whole rows (TN == N, allowed even when
    # N is not a multiple of 128) and span enough samples to hit the target.
    tn = n
    tb_target = max(1, target_elems // max(n, 1))
    if tb_target >= b:
        tb = b
    else:
        tb = max(8, (tb_target // 8) * 8)
    return tb, tn


def drop_path_pallas(x, key, drop_prob: float = 0.1, training: bool = True):
    """Pallas DropPath forward. x: (B, ...) any trailing shape."""
    if drop_prob == 0.0 or not training:
        return x

    keep_prob = 1.0 - drop_prob
    b = x.shape[0]
    n = 1
    for d in x.shape[1:]:
        n *= d

    # Per-sample scale in float32 (avoids bf16 bias in the uniform / floor /
    # reciprocal), shaped (B, 1) so it broadcasts against the (TB, TN) tile.
    u = jax.random.uniform(key, (b, 1), dtype=jnp.float32)
    mask = jnp.floor(keep_prob + u)                      # 0.0 or 1.0
    scale = mask * (1.0 / keep_prob)                     # (B, 1) float32

    x2 = x.reshape(b, n)
    tb, tn = _choose_tiles(b, n, jnp.dtype(x.dtype).itemsize)
    grid = (pl.cdiv(b, tb), pl.cdiv(n, tn))

    out2 = pl.pallas_call(
        _drop_path_kernel,
        out_shape=jax.ShapeDtypeStruct((b, n), x.dtype),
        grid=grid,
        in_specs=[
            pl.BlockSpec((tb, 1), lambda i, j: (i, 0)),      # scale (B, 1)
            pl.BlockSpec((tb, tn), lambda i, j: (i, j)),     # x     (B, N)
        ],
        out_specs=pl.BlockSpec((tb, tn), lambda i, j: (i, j)),
        compiler_params=pltpu.CompilerParams(
            dimension_semantics=("parallel", "parallel"),
            vmem_limit_bytes=40 << 20,
        ),
    )(scale, x2)

    return out2.reshape(x.shape)


class DropPathPallas:
    """Minimal stand-in for the nn.Module wrapper."""

    def __init__(self, drop_prob: float = 0.1):
        self.drop_prob = drop_prob
        self.training = True

    def __call__(self, x, key):
        return drop_path_pallas(x, key, self.drop_prob, self.training)


def _reference(x, key, drop_prob):
    keep_prob = 1.0 - drop_prob
    u = jax.random.uniform(key, (x.shape[0], 1), dtype=jnp.float32)
    mask = jnp.floor(keep_prob + u).reshape((x.shape[0],) + (1,) * (x.ndim - 1))
    return x / keep_prob * mask


if __name__ == "__main__":
    key = jax.random.PRNGKey(0)
    key_x, key_x2, key_drop = jax.random.split(key, 3)

    module = DropPathPallas(drop_prob=0.1)

    # Small NCHW input consistent with the module's forward (N = 1024, a
    # multiple of 128).
    x = jax.random.normal(key_x, (2, 4, 16, 16), dtype=jnp.float32)
    y = jax.block_until_ready(module(x, key_drop))
    y_ref = _reference(x, key_drop, module.drop_prob)
    assert jnp.allclose(y, y_ref, rtol=1e-6, atol=1e-6), "mismatch vs reference"

    # Ragged per-sample size (N = 400, NOT a multiple of 128): exercises the
    # no-pad / full-row-block path.
    x_r = jax.random.normal(key_x2, (2, 4, 10, 10), dtype=jnp.float32)
    y_r = jax.block_until_ready(module(x_r, key_drop))
    y_r_ref = _reference(x_r, key_drop, module.drop_prob)
    assert jnp.allclose(y_r, y_r_ref, rtol=1e-6, atol=1e-6), "ragged mismatch"

    # Eval path: identity.
    module.training = False
    y_eval = jax.block_until_ready(module(x, key_drop))
    assert jnp.array_equal(y_eval, x)

    print("KERNEL_OK")
</pallas_src>

<mosaic_0001>
module attributes {stable_mosaic.version = 11 : i64} {
  func.func @_drop_path_kernel(%arg0: i32, %arg1: i32, %arg2: memref<2x1xf32, #tpu.memory_space<vmem>>, %arg3: memref<2x1024xf32, #tpu.memory_space<vmem>>, %arg4: memref<2x1024xf32, #tpu.memory_space<vmem>>) attributes {dimension_semantics = [#tpu.dimension_semantics<parallel>, #tpu.dimension_semantics<parallel>], iteration_bounds = array<i64: 1, 1>, scalar_prefetch = 0 : i64, scratch_operands = 0 : i64, tpu.core_type = #tpu.core_type<tc>, window_params = [{transform_indices = @transform_0, window_bounds = array<i64: 2, 1>}, {transform_indices = @transform_1, window_bounds = array<i64: 2, 1024>}, {transform_indices = @transform_2, window_bounds = array<i64: 2, 1024>}]} {
    %c0 = arith.constant 0 : index
    %c0_0 = arith.constant 0 : index
    %0 = vector.load %arg3[%c0, %c0_0] : memref<2x1024xf32, #tpu.memory_space<vmem>>, vector<2x1024xf32>
    %c0_1 = arith.constant 0 : index
    %c0_2 = arith.constant 0 : index
    %1 = vector.load %arg2[%c0_1, %c0_2] : memref<2x1xf32, #tpu.memory_space<vmem>>, vector<2x1xf32>
    %2 = vector.broadcast %1 : vector<2x1xf32> to vector<2x1024xf32>
    %3 = arith.mulf %0, %2 : vector<2x1024xf32>
    %c0_3 = arith.constant 0 : index
    %c0_4 = arith.constant 0 : index
    %4 = vector.load %arg4[%c0_3, %c0_4] : memref<2x1024xf32, #tpu.memory_space<vmem>>, vector<2x1024xf32>
    tpu.vector_store %arg4[%c0_3, %c0_4], %3 {strides = array<i32>} : memref<2x1024xf32, #tpu.memory_space<vmem>>, vector<2x1024xf32>,
    return
  }
  func.func @transform_0(%arg0: i32, %arg1: i32) -> (i32, i32) {
    %c0_i32 = arith.constant 0 : i32
    %c0_i32_0 = arith.constant 0 : i32
    return %arg0, %c0_i32 : i32, i32
  }
  func.func @transform_1(%arg0: i32, %arg1: i32) -> (i32, i32) {
    %c0_i32 = arith.constant 0 : i32
    return %arg0, %arg1 : i32, i32
  }
  func.func @transform_2(%arg0: i32, %arg1: i32) -> (i32, i32) {
    %c0_i32 = arith.constant 0 : i32
    return %arg0, %arg1 : i32, i32
  }
}

</mosaic_0001>

<llo_original>
// kernel: tpu_custom_call.1
$region0: #{tpu_custom_call.1}
  #allocation0 [shape = 'u32[]', space=smem, size = 0x4, offset = 0x4, fixed_abs, tag = 'smem constant byte address 0x4 - core index']
  #allocation1 [shape = 'u32[144,128]{1,0:T(1,128)}', space=vmem, size = 0x12000, scoped, tag = 'internal scratch']
  %s0 = inlined_call_operand.vmem [shape: f32[2,1], index: 0, kind: input, shape index: {}]
  %s1 = inlined_call_operand.hbm [shape: f32[2,1024], index: 1, kind: input, shape index: {}]
  %s2 = inlined_call_operand.hbm [shape: f32[2,1024], index: 2, kind: output, shape index: {}]
  %s3 = sld [smem:[#allocation0]]
  $region22: #{tpu_custom_call.1} parent=0
    _
  %s5 = ssub.s32 1, %s3
  %s6 = scalar_select 0, %s5, %s3
  $region1: #{tpu_custom_call.1} parent=0
    #allocation2 [shape = 'u8[8192]{0}', space=vmem, size = 0x2000, scoped, tag = 'input window, operand 1, single buffered']
    #allocation3 [shape = 's32[1]{0}', space=sflag, size = 0x4, scoped, tag = 'scoped memory for tpu_custom_call.1']
    #allocation4 [shape = 's32[1]{0}', space=sflag, size = 0x4, scoped, tag = 'scoped memory for tpu_custom_call.1']
    #allocation5 [shape = 'u8[8192]{0}', space=vmem, size = 0x2000, scoped, tag = 'output window, operand 0, single buffered']
    %7 = vsyncpa [#allocation3], 0
    %8 = vsyncpa [#allocation4], 0
    // Predicated region
    $region2: #{tpu_custom_call.1} parent=1 // pred_check
      _
    $region3: #{tpu_custom_call.1} parent=1 // pred_check_branch
      %10 = sbr.rel (0) target = $region5
    $region4: #{tpu_custom_call.1} parent=1 // pred_region
      _
    $region5: #{tpu_custom_call.1} parent=1 // pred_fallthru
      _
    // Predicated region
    $region6: #{tpu_custom_call.1} parent=1 // pred_check
      _
    $region7: #{tpu_custom_call.1} parent=1 // pred_check_branch
      %12 = sbr.rel (0) target = $region9
    $region8: #{tpu_custom_call.1} parent=1 // pred_region
      %s14 = ssub.s32 256, 256
      %15 = vsyncadd [#allocation3], %s14
      %s17 = sshll.u32 [#allocation2], 4
      %s18 = int_to_ptr.vmem [resolvable:$true] %s17
      %20 = dma.hbm_to_vmem [thread:$0]  %s1, 256, %s18, [#allocation3]
    $region9: #{tpu_custom_call.1} parent=1 // pred_fallthru
      _
    // Predicated region
    $region10: #{tpu_custom_call.1} parent=1 // pred_check
      _
    $region11: #{tpu_custom_call.1} parent=1 // pred_check_branch
      %22 = sbr.rel (0) target = $region13
    $region12: #{tpu_custom_call.1} parent=1 // pred_region
      %23 = dma.done [#allocation3], 256
    $region13: #{tpu_custom_call.1} parent=1 // pred_fallthru
      _
    %v24 = vld [vmem:[#allocation2] sm:$0xff]
    %v25 = vld [vmem:[#allocation2 + $0x8] sm:$0xff]
    %v26 = vld [vmem:[%s0] sm:$0x3]
    %28 = vset.pattern.permute.xlu0 0
    %29 = vperm.xlu0 %28, %v26
    %v30 = vpop.permute.xlu0 %29
    %v32 = vunpack.c.l.s4 269488144
    %v33 = vunpack.c.0.s8 %v32
    %v34 = vlaneseq
    %v35 = vshrl.u32 %v34, 7
    %v36 = vsub.s32 %v33, %v35
    %v37 = vrot.slane %v30, %v36
    %v39 = vmul.f32 %v24, %v37
    %v40 = vmul.f32 %v25, %v37
    %41 = vst [vmem:[#allocation5] sm:$0xff] %v39
    %42 = vst [vmem:[#allocation5 + $0x8] sm:$0xff] %v40
    // Predicated region
    $region14: #{tpu_custom_call.1} parent=1 // pred_check
      _
    $region15: #{tpu_custom_call.1} parent=1 // pred_check_branch
      %44 = sbr.rel (0) target = $region17
    $region16: #{tpu_custom_call.1} parent=1 // pred_region
      %s46 = ssub.s32 256, 256
      %47 = vsyncadd [#allocation4], %s46
      %s49 = sshll.u32 [#allocation5], 4
      %s50 = int_to_ptr.vmem [resolvable:$true] %s49
      %52 = dma.vmem_to_hbm [thread:$0]  %s50, 256, %s2, [#allocation4]
    $region17: #{tpu_custom_call.1} parent=1 // pred_fallthru
      _
    // Predicated region
    $region18: #{tpu_custom_call.1} parent=1 // pred_check
      _
    $region19: #{tpu_custom_call.1} parent=1 // pred_check_branch
      %54 = sbr.rel (0) target = $region21
    $region20: #{tpu_custom_call.1} parent=1 // pred_region
      %55 = dma.done [#allocation4], 256
    $region21: #{tpu_custom_call.1} parent=1 // pred_fallthru
      _
    %56 = vsyncpa [#allocation3], 1
    %57 = vsyncpa [#allocation4], 1

</llo_original>
